<compile_context>
chip_gen: v6e
topology: v6e:2x2x1
jax: 0.10.0
libtpu: 0.0.40
codegen_flags: <defaults>
</compile_context>

<pallas_src>
import functools

import jax
import jax.numpy as jnp
from jax.experimental import pallas as pl
from jax.experimental.pallas import tpu as pltpu


def _round_up(x, m):
    return (x + m - 1) // m * m


# ---------------------------------------------------------------------------
# Pallas kernel: one TemporalBlock per grid step (grid = (batch, layer))
# ---------------------------------------------------------------------------
def fused_tcn_kernel(dil_ref, ds_ref, x_ref, w1_ref, w2_ref, *rest,
                     kernel_size, c_pad, t_pad, bias_rows, any_downsample):
    if any_downsample:
        wd_ref, o_ref, stk_ref, cur_ref = rest
    else:
        wd_ref = None
        o_ref, stk_ref, cur_ref = rest

    K, Cp, Tp = kernel_size, c_pad, t_pad
    cdt = stk_ref.dtype
    l = pl.program_id(1)
    d = dil_ref[l]                                   # this layer's dilation

    # Lane index, hoisted once per grid step (used by every causal mask).
    lane = jax.lax.broadcasted_iota(jnp.int32, (Cp, Tp), 1)

    @pl.when(l == 0)
    def _init():
        # Load this batch item into the f32 carry and write the lane-dense
        # bias block (row 0 = ones) ONCE; it is never overwritten afterwards.
        cur_ref[...] = x_ref[0].astype(jnp.float32)
        row = jax.lax.broadcasted_iota(jnp.int32, (bias_rows, Tp), 0)
        stk_ref[pl.ds(K * Cp, bias_rows), :] = jnp.where(
            row == 0, 1.0, 0.0).astype(cdt)

    def fill_taps(src_f32):
        """Write the K causally-shifted taps of `src` into the stacked scratch."""
        src = src_f32.astype(cdt)
        stk_ref[pl.ds((K - 1) * Cp, Cp), :] = src            # zero-shift tap
        for j in range(K - 1):                               # dilated taps
            s = d * (K - 1 - j)                              # dynamic shift
            rolled = pltpu.roll(src, s % Tp, axis=1)         # XLU lane rotate
            stk_ref[pl.ds(j * Cp, Cp), :] = jnp.where(       # causal mask
                lane >= s, rolled, jnp.zeros_like(rolled))

    cur = cur_ref[...]                                       # layer input (f32)

    # ---- conv1 + bias: ONE MXU matmul off the stacked scratch --------------
    fill_taps(cur)
    h1 = jnp.dot(w1_ref[0], stk_ref[...], preferred_element_type=jnp.float32)

    # ---- residual path: feeds the zero-shift tap + bias rows as a *ref
    #      slice* of the scratch (no value-slice copy); must run before the
    #      scratch is reused for conv2.  Identity layers keep the f32 carry.
    if any_downsample:
        res_in = stk_ref[pl.ds((K - 1) * Cp, Cp + bias_rows), :]
        res_ds = jnp.dot(wd_ref[0], res_in, preferred_element_type=jnp.float32)
        gate = ds_ref[l].astype(jnp.float32)                 # 1.0 iff downsample
        res = gate * res_ds + (1.0 - gate) * cur
    else:
        res = cur

    h1 = jnp.maximum(h1, 0.0)                                # relu1 (dropout=id)

    # ---- conv2 + bias (same scratch, rebuilt in place) ----------------------
    fill_taps(h1)
    h2 = jnp.dot(w2_ref[0], stk_ref[...], preferred_element_type=jnp.float32)
    h2 = jnp.maximum(h2, 0.0)                                # relu2 (dropout=id)

    out = jnp.maximum(h2 + res, 0.0)                         # block output relu
    cur_ref[...] = out                                       # f32 carry -> l+1

    @pl.when(l == pl.num_programs(1) - 1)
    def _finalize():
        o_ref[0] = out.astype(o_ref.dtype)


# ---------------------------------------------------------------------------
# Wrapper: pack weights, pad activations, call the fused kernel
# ---------------------------------------------------------------------------
def temporal_conv_net(x, params, kernel_size, compute_dtype=jnp.bfloat16):
    """x: (B, Cin, T) f32.  params[i]: dict with
       w1: (Cout, Cin, K), b1: (Cout,), w2: (Cout, Cout, K), b2: (Cout,),
       wd: (Cout, Cin) or None, bd: (Cout,) or None, dilation: int."""
    B, Cin, T = x.shape
    K = kernel_size
    L = len(params)

    chans = [Cin] + [p["w1"].shape[0] for p in params]
    Cp = _round_up(max(chans), 16)               # sublane friendly
    Tp = _round_up(max(T, 128), 128)             # lane dense
    itemc = jnp.dtype(compute_dtype).itemsize
    BIAS_ROWS = 8 if itemc == 4 else 16          # dtype sublane pack
    Cstk = K * Cp + BIAS_ROWS

    dilations = jnp.array([int(p["dilation"]) for p in params], jnp.int32)
    has_ds = [p["wd"] is not None for p in params]
    any_ds = any(has_ds)
    ds_flags = jnp.array([1 if h else 0 for h in has_ds], jnp.int32)
    Cout_final = params[-1]["w1"].shape[0]

    def pack_conv(w, b):
        cout, cin_l, _ = w.shape
        wp = jnp.zeros((Cp, Cstk), jnp.float32)
        for j in range(K):
            wp = wp.at[:cout, j * Cp: j * Cp + cin_l].set(w[:, :, j])
        wp = wp.at[:cout, K * Cp].set(b)         # bias -> extra weight column
        return wp

    def pack_down(w, b):
        wp = jnp.zeros((Cp, Cp + BIAS_ROWS), jnp.float32)
        if w is None:
            return wp                            # identity residual (unused)
        cout, cin_l = w.shape
        wp = wp.at[:cout, :cin_l].set(w)
        wp = wp.at[:cout, Cp].set(b)
        return wp

    w1_all = jnp.stack([pack_conv(p["w1"], p["b1"]) for p in params]).astype(compute_dtype)
    w2_all = jnp.stack([pack_conv(p["w2"], p["b2"]) for p in params]).astype(compute_dtype)
    x_p = jnp.pad(x, ((0, 0), (0, Cp - Cin), (0, Tp - T))).astype(compute_dtype)

    in_specs = [
        pl.BlockSpec((1, Cp, Tp), lambda b, l, dil, ds: (b, 0, 0)),     # x
        pl.BlockSpec((1, Cp, Cstk), lambda b, l, dil, ds: (l, 0, 0)),   # w1 (per layer)
        pl.BlockSpec((1, Cp, Cstk), lambda b, l, dil, ds: (l, 0, 0)),   # w2 (per layer)
    ]
    inputs = [x_p, w1_all, w2_all]
    if any_ds:
        wd_all = jnp.stack([pack_down(p["wd"], p["bd"]) for p in params]).astype(compute_dtype)
        in_specs.append(pl.BlockSpec((1, Cp, Cp + BIAS_ROWS),
                                     lambda b, l, dil, ds: (l, 0, 0)))
        inputs.append(wd_all)

    # Explicit scoped-VMEM limit from the real per-step footprint (v5e default
    # is only 16 MiB); generous headroom, capped below v7x's 64 MiB physical.
    f32b = 4
    footprint = (
        2 * Cp * Tp * itemc                      # x block (double-buffered)
        + 2 * Cp * Tp * f32b                     # out block (double-buffered)
        + 2 * 2 * Cp * Cstk * itemc              # w1 + w2 per-layer blocks (db)
        + (2 * Cp * (Cp + BIAS_ROWS) * itemc if any_ds else 0)
        + Cstk * Tp * itemc                      # stacked-operand scratch
        + Cp * Tp * f32b                         # f32 carry scratch
        + 8 * Cp * Tp * f32b                     # live f32 temps headroom
    )
    vmem_limit = int(min(64 << 20, max(4 * footprint, 16 << 20)))

    flops_step = 2 * Cp * Cstk * Tp * 2
    if any_ds:
        flops_step += 2 * Cp * (Cp + BIAS_ROWS) * Tp
    bytes_accessed = (B * Cp * Tp * (itemc + f32b)
                      + B * (w1_all.size + w2_all.size) * itemc
                      + (B * L * Cp * (Cp + BIAS_ROWS) * itemc if any_ds else 0))
    cost = pl.CostEstimate(flops=int(flops_step * B * L), transcendentals=0,
                           bytes_accessed=int(bytes_accessed))

    kernel = functools.partial(
        fused_tcn_kernel, kernel_size=K, c_pad=Cp, t_pad=Tp,
        bias_rows=BIAS_ROWS, any_downsample=any_ds)

    grid_spec = pltpu.PrefetchScalarGridSpec(
        num_scalar_prefetch=2,
        grid=(B, L),
        in_specs=in_specs,
        out_specs=pl.BlockSpec((1, Cp, Tp), lambda b, l, dil, ds: (b, 0, 0)),
        scratch_shapes=[pltpu.VMEM((Cstk, Tp), compute_dtype),   # stacked operand
                        pltpu.VMEM((Cp, Tp), jnp.float32)])      # f32 carry

    out = pl.pallas_call(
        kernel,
        out_shape=jax.ShapeDtypeStruct((B, Cp, Tp), jnp.float32),
        grid_spec=grid_spec,
        compiler_params=pltpu.CompilerParams(
            dimension_semantics=("parallel", "arbitrary"),
            vmem_limit_bytes=vmem_limit),
        cost_estimate=cost,
    )(dilations, ds_flags, *inputs)

    return out[:, :Cout_final, :T]


# ---------------------------------------------------------------------------
# Parameter construction (deterministic, synthetic)
# ---------------------------------------------------------------------------
def weight_norm_effective(v, g):
    # PyTorch weight_norm(dim=0): W = g * v / ||v||  (norm over dims (1,2))
    norm = jnp.sqrt(jnp.sum(v * v, axis=(1, 2), keepdims=True))
    return g * v / norm


def init_tcn_params(key, num_inputs, num_channels, kernel_size):
    params = []
    for i, out_ch in enumerate(num_channels):
        in_ch = num_inputs if i == 0 else num_channels[i - 1]
        key, k1, k2, k3, k4, k5, k6, k7, k8 = jax.random.split(key, 9)

        v1 = 0.01 * jax.random.normal(k1, (out_ch, in_ch, kernel_size), jnp.float32)
        g1 = 0.5 + jax.random.uniform(k2, (out_ch, 1, 1), jnp.float32)
        w1 = weight_norm_effective(v1, g1)
        b1 = 0.01 * jax.random.normal(k3, (out_ch,), jnp.float32)

        v2 = 0.01 * jax.random.normal(k4, (out_ch, out_ch, kernel_size), jnp.float32)
        g2 = 0.5 + jax.random.uniform(k5, (out_ch, 1, 1), jnp.float32)
        w2 = weight_norm_effective(v2, g2)
        b2 = 0.01 * jax.random.normal(k6, (out_ch,), jnp.float32)

        if in_ch != out_ch:
            wd = 0.01 * jax.random.normal(k7, (out_ch, in_ch), jnp.float32)
            bd = 0.01 * jax.random.normal(k8, (out_ch,), jnp.float32)
        else:
            wd, bd = None, None          # identity residual (no downsample)

        params.append(dict(w1=w1, b1=b1, w2=w2, b2=b2, wd=wd, bd=bd,
                           dilation=2 ** i))
    return params


# ---------------------------------------------------------------------------
# Pure-JAX reference (lax.conv) for correctness verification
# ---------------------------------------------------------------------------
def ref_temporal_conv_net(x, params, kernel_size):
    def causal_conv(inp, w, b, d):
        pad = d * (kernel_size - 1)
        y = jax.lax.conv_general_dilated(
            inp, w, window_strides=(1,), padding=[(pad, pad)],
            rhs_dilation=(d,), dimension_numbers=("NCH", "OIH", "NCH"))
        y = y[:, :, : inp.shape[2]]                          # Chomp1d
        return y + b.reshape(1, -1, 1)

    out = x
    for p in params:
        h1 = jnp.maximum(causal_conv(out, p["w1"], p["b1"], p["dilation"]), 0.0)
        h2 = jnp.maximum(causal_conv(h1, p["w2"], p["b2"], p["dilation"]), 0.0)
        if p["wd"] is not None:
            res = jnp.einsum("oc,bct->bot", p["wd"], out) + p["bd"].reshape(1, -1, 1)
        else:
            res = out
        out = jnp.maximum(h2 + res, 0.0)
    return out


if __name__ == "__main__":
    key = jax.random.PRNGKey(0)

    # ---- Config 1: TemporalConvNet(4, [8, 8], kernel_size=2), has downsample
    num_inputs, num_channels, kernel_size = 4, [8, 8], 2
    B, T = 2, 16
    kx, kp, key = jax.random.split(key, 3)
    x = jax.random.normal(kx, (B, num_inputs, T), jnp.float32)      # (N, C, L)
    params = init_tcn_params(kp, num_inputs, num_channels, kernel_size)
    ref = ref_temporal_conv_net(x, params, kernel_size)

    out_f32 = jax.block_until_ready(
        temporal_conv_net(x, params, kernel_size, compute_dtype=jnp.float32))
    assert out_f32.shape == (B, num_channels[-1], T)
    assert jnp.allclose(out_f32, ref, atol=3e-4, rtol=3e-4), "f32 mismatch (config 1)"

    def rt(t):
        return None if t is None else t.astype(jnp.bfloat16).astype(jnp.float32)

    params_r = [dict(w1=rt(p["w1"]), b1=rt(p["b1"]), w2=rt(p["w2"]), b2=rt(p["b2"]),
                     wd=rt(p["wd"]), bd=rt(p["bd"]), dilation=p["dilation"])
                for p in params]
    ref_bf = ref_temporal_conv_net(rt(x), params_r, kernel_size)
    out_bf16 = jax.block_until_ready(
        temporal_conv_net(x, params, kernel_size, compute_dtype=jnp.bfloat16))
    assert out_bf16.shape == (B, num_channels[-1], T)
    assert jnp.allclose(out_bf16, ref_bf, atol=1e-1, rtol=1e-1), "bf16 mismatch (config 1)"

    # ---- Config 2: all-identity residuals (no downsample path), K=3, odd T
    num_inputs2, num_channels2, kernel_size2 = 4, [4, 4, 4], 3
    B2, T2 = 1, 20
    kx2, kp2, key = jax.random.split(key, 3)
    x2 = jax.random.normal(kx2, (B2, num_inputs2, T2), jnp.float32)
    params2 = init_tcn_params(kp2, num_inputs2, num_channels2, kernel_size2)
    ref2 = ref_temporal_conv_net(x2, params2, kernel_size2)
    out2 = jax.block_until_ready(
        temporal_conv_net(x2, params2, kernel_size2, compute_dtype=jnp.float32))
    assert out2.shape == (B2, num_channels2[-1], T2)
    assert jnp.allclose(out2, ref2, atol=3e-4, rtol=3e-4), "f32 mismatch (config 2)"

    print("KERNEL_OK")
</pallas_src>

<mosaic_0001>
module attributes {stable_mosaic.version = 11 : i64} {
  func.func @fused_tcn_kernel(%arg0: i32, %arg1: i32, %arg2: memref<2xi32, #tpu.memory_space<smem>>, %arg3: memref<2xi32, #tpu.memory_space<smem>>, %arg4: memref<1x16x128xf32, #tpu.memory_space<vmem>>, %arg5: memref<1x16x40xf32, #tpu.memory_space<vmem>>, %arg6: memref<1x16x40xf32, #tpu.memory_space<vmem>>, %arg7: memref<1x16x24xf32, #tpu.memory_space<vmem>>, %arg8: memref<1x16x128xf32, #tpu.memory_space<vmem>>, %arg9: memref<40x128xf32, #tpu.memory_space<vmem>>, %arg10: memref<16x128xf32, #tpu.memory_space<vmem>>) attributes {dimension_semantics = [#tpu.dimension_semantics<parallel>, #tpu.dimension_semantics<arbitrary>], iteration_bounds = array<i64: 2, 2>, scalar_prefetch = 2 : i64, scratch_operands = 2 : i64, tpu.core_type = #tpu.core_type<tc>, window_params = [{transform_indices = @transform_0, window_bounds = array<i64: 1, 16, 128>}, {transform_indices = @transform_1, window_bounds = array<i64: 1, 16, 40>}, {transform_indices = @transform_2, window_bounds = array<i64: 1, 16, 40>}, {transform_indices = @transform_3, window_bounds = array<i64: 1, 16, 24>}, {transform_indices = @transform_4, window_bounds = array<i64: 1, 16, 128>}]} {
    %0 = arith.index_cast %arg1 : i32 to index
    %1 = memref.load %arg2[%0] : memref<2xi32, #tpu.memory_space<smem>>
    %2 = tpu.iota {dimensions = array<i32: 1>} : vector<16x128xi32>
    %c0_i32 = arith.constant 0 : i32
    %3 = arith.cmpi eq, %arg1, %c0_i32 : i32
    %4 = arith.extui %3 : i1 to i32
    %c0_i32_0 = arith.constant 0 : i32
    %5 = arith.cmpi ne, %4, %c0_i32_0 : i32
    scf.if %5 {
      %c0_48 = arith.constant 0 : index
      %c0_49 = arith.constant 0 : index
      %c0_50 = arith.constant 0 : index
      %75 = vector.load %arg4[%c0_48, %c0_49, %c0_50] : memref<1x16x128xf32, #tpu.memory_space<vmem>>, vector<1x16x128xf32>
      %76 = vector.shape_cast %75 : vector<1x16x128xf32> to vector<16x128xf32>
      %c0_51 = arith.constant 0 : index
      %c0_52 = arith.constant 0 : index
      %77 = vector.load %arg10[%c0_51, %c0_52] : memref<16x128xf32, #tpu.memory_space<vmem>>, vector<16x128xf32>
      tpu.vector_store %arg10[%c0_51, %c0_52], %76 {strides = array<i32>} : memref<16x128xf32, #tpu.memory_space<vmem>>, vector<16x128xf32>,
      %78 = tpu.iota {dimensions = array<i32: 0>} : vector<8x128xi32>
      %c0_i32_53 = arith.constant 0 : i32
      %79 = vector.broadcast %c0_i32_53 : i32 to vector<8x128xi32>
      %80 = arith.cmpi eq, %78, %79 : vector<8x128xi32>
      %cst_54 = arith.constant 1.000000e+00 : f32
      %cst_55 = arith.constant 0.000000e+00 : f32
      %81 = vector.broadcast %cst_54 : f32 to vector<8x128xf32>
      %82 = vector.broadcast %cst_55 : f32 to vector<8x128xf32>
      %83 = arith.select %80, %81, %82 : vector<8x128xi1>, vector<8x128xf32>
      %c32 = arith.constant 32 : index
      %c0_56 = arith.constant 0 : index
      %84 = vector.load %arg9[%c32, %c0_56] : memref<40x128xf32, #tpu.memory_space<vmem>>, vector<8x128xf32>
      tpu.vector_store %arg9[%c32, %c0_56], %83 {strides = array<i32>} : memref<40x128xf32, #tpu.memory_space<vmem>>, vector<8x128xf32>,
    } else {
    }
    %c0 = arith.constant 0 : index
    %c0_1 = arith.constant 0 : index
    %6 = vector.load %arg10[%c0, %c0_1] : memref<16x128xf32, #tpu.memory_space<vmem>>, vector<16x128xf32>
    %c16 = arith.constant 16 : index
    %c0_2 = arith.constant 0 : index
    %7 = vector.load %arg9[%c16, %c0_2] : memref<40x128xf32, #tpu.memory_space<vmem>>, vector<16x128xf32>
    tpu.vector_store %arg9[%c16, %c0_2], %6 {strides = array<i32>} : memref<40x128xf32, #tpu.memory_space<vmem>>, vector<16x128xf32>,
    %c1_i32 = arith.constant 1 : i32
    %8 = arith.muli %1, %c1_i32 : i32
    %c128_i32 = arith.constant 128 : i32
    %c0_i32_3 = arith.constant 0 : i32
    %9 = arith.cmpi eq, %c128_i32, %c0_i32_3 : i32
    %c1_i32_4 = arith.constant 1 : i32
    %10 = arith.select %9, %c1_i32_4, %c128_i32 : i32
    %11 = arith.remsi %8, %10 : i32
    %c0_i32_5 = arith.constant 0 : i32
    %12 = arith.cmpi ne, %11, %c0_i32_5 : i32
    %c0_i32_6 = arith.constant 0 : i32
    %13 = arith.cmpi slt, %11, %c0_i32_6 : i32
    %c0_i32_7 = arith.constant 0 : i32
    %14 = arith.cmpi slt, %10, %c0_i32_7 : i32
    %15 = arith.xori %13, %14 : i1
    %16 = arith.andi %15, %12 : i1
    %17 = arith.addi %11, %10 : i32
    %18 = arith.select %16, %17, %11 : i32
    %19 = tpu.dynamic_rotate %6 by %18 dim 1 : vector<16x128xf32>, i32 -> vector<16x128xf32>
    %20 = vector.broadcast %8 : i32 to vector<16x128xi32>
    %21 = arith.cmpi sge, %2, %20 : vector<16x128xi32>
    %cst = arith.constant 0.000000e+00 : f32
    %22 = vector.broadcast %cst : f32 to vector<16x128xf32>
    %23 = arith.select %21, %19, %22 : vector<16x128xi1>, vector<16x128xf32>
    %c0_8 = arith.constant 0 : index
    %c0_9 = arith.constant 0 : index
    %24 = vector.load %arg9[%c0_8, %c0_9] : memref<40x128xf32, #tpu.memory_space<vmem>>, vector<16x128xf32>
    tpu.vector_store %arg9[%c0_8, %c0_9], %23 {strides = array<i32>} : memref<40x128xf32, #tpu.memory_space<vmem>>, vector<16x128xf32>,
    %c0_10 = arith.constant 0 : index
    %c0_11 = arith.constant 0 : index
    %c0_12 = arith.constant 0 : index
    %25 = vector.load %arg5[%c0_10, %c0_11, %c0_12] : memref<1x16x40xf32, #tpu.memory_space<vmem>>, vector<1x16x40xf32>
    %26 = vector.shape_cast %25 : vector<1x16x40xf32> to vector<16x40xf32>
    %c0_13 = arith.constant 0 : index
    %c0_14 = arith.constant 0 : index
    %27 = vector.load %arg9[%c0_13, %c0_14] : memref<40x128xf32, #tpu.memory_space<vmem>>, vector<40x128xf32>
    %cst_15 = arith.constant dense<0.000000e+00> : vector<16x128xf32>
    %28 = tpu.matmul %26, %27, %cst_15 {dimension_numbers = #tpu.dot_dimension_numbers<[1], [0], [0], [1], [0, 0, 1, 1], [], []>} : vector<16x40xf32>, vector<40x128xf32>, vector<16x128xf32> -> vector<16x128xf32>
    %c16_16 = arith.constant 16 : index
    %c0_17 = arith.constant 0 : index
    %29 = vector.load %arg9[%c16_16, %c0_17] : memref<40x128xf32, #tpu.memory_space<vmem>>, vector<24x128xf32>
    %c0_18 = arith.constant 0 : index
    %c0_19 = arith.constant 0 : index
    %c0_20 = arith.constant 0 : index
    %30 = vector.load %arg7[%c0_18, %c0_19, %c0_20] : memref<1x16x24xf32, #tpu.memory_space<vmem>>, vector<1x16x24xf32>
    %31 = vector.shape_cast %30 : vector<1x16x24xf32> to vector<16x24xf32>
    %cst_21 = arith.constant dense<0.000000e+00> : vector<16x128xf32>
    %32 = tpu.matmul %31, %29, %cst_21 {dimension_numbers = #tpu.dot_dimension_numbers<[1], [0], [0], [1], [0, 0, 1, 1], [], []>} : vector<16x24xf32>, vector<24x128xf32>, vector<16x128xf32> -> vector<16x128xf32>
    %33 = arith.index_cast %arg1 : i32 to index
    %34 = memref.load %arg3[%33] : memref<2xi32, #tpu.memory_space<smem>>
    %35 = arith.sitofp %34 : i32 to f32
    %36 = vector.broadcast %35 : f32 to vector<16x128xf32>
    %37 = arith.mulf %36, %32 : vector<16x128xf32>
    %cst_22 = arith.constant 1.000000e+00 : f32
    %38 = arith.subf %cst_22, %35 : f32
    %39 = vector.broadcast %38 : f32 to vector<16x128xf32>
    %40 = arith.mulf %39, %6 : vector<16x128xf32>
    %41 = arith.addf %37, %40 : vector<16x128xf32>
    %cst_23 = arith.constant 0.000000e+00 : f32
    %42 = vector.broadcast %cst_23 : f32 to vector<16x128xf32>
    %43 = arith.maximumf %28, %42 : vector<16x128xf32>
    %c16_24 = arith.constant 16 : index
    %c0_25 = arith.constant 0 : index
    %44 = vector.load %arg9[%c16_24, %c0_25] : memref<40x128xf32, #tpu.memory_space<vmem>>, vector<16x128xf32>
    tpu.vector_store %arg9[%c16_24, %c0_25], %43 {strides = array<i32>} : memref<40x128xf32, #tpu.memory_space<vmem>>, vector<16x128xf32>,
    %c1_i32_26 = arith.constant 1 : i32
    %45 = arith.muli %1, %c1_i32_26 : i32
    %c128_i32_27 = arith.constant 128 : i32
    %c0_i32_28 = arith.constant 0 : i32
    %46 = arith.cmpi eq, %c128_i32_27, %c0_i32_28 : i32
    %c1_i32_29 = arith.constant 1 : i32
    %47 = arith.select %46, %c1_i32_29, %c128_i32_27 : i32
    %48 = arith.remsi %45, %47 : i32
    %c0_i32_30 = arith.constant 0 : i32
    %49 = arith.cmpi ne, %48, %c0_i32_30 : i32
    %c0_i32_31 = arith.constant 0 : i32
    %50 = arith.cmpi slt, %48, %c0_i32_31 : i32
    %c0_i32_32 = arith.constant 0 : i32
    %51 = arith.cmpi slt, %47, %c0_i32_32 : i32
    %52 = arith.xori %50, %51 : i1
    %53 = arith.andi %52, %49 : i1
    %54 = arith.addi %48, %47 : i32
    %55 = arith.select %53, %54, %48 : i32
    %56 = tpu.dynamic_rotate %43 by %55 dim 1 : vector<16x128xf32>, i32 -> vector<16x128xf32>
    %57 = vector.broadcast %45 : i32 to vector<16x128xi32>
    %58 = arith.cmpi sge, %2, %57 : vector<16x128xi32>
    %cst_33 = arith.constant 0.000000e+00 : f32
    %59 = vector.broadcast %cst_33 : f32 to vector<16x128xf32>
    %60 = arith.select %58, %56, %59 : vector<16x128xi1>, vector<16x128xf32>
    %c0_34 = arith.constant 0 : index
    %c0_35 = arith.constant 0 : index
    %61 = vector.load %arg9[%c0_34, %c0_35] : memref<40x128xf32, #tpu.memory_space<vmem>>, vector<16x128xf32>
    tpu.vector_store %arg9[%c0_34, %c0_35], %60 {strides = array<i32>} : memref<40x128xf32, #tpu.memory_space<vmem>>, vector<16x128xf32>,
    %c0_36 = arith.constant 0 : index
    %c0_37 = arith.constant 0 : index
    %c0_38 = arith.constant 0 : index
    %62 = vector.load %arg6[%c0_36, %c0_37, %c0_38] : memref<1x16x40xf32, #tpu.memory_space<vmem>>, vector<1x16x40xf32>
    %63 = vector.shape_cast %62 : vector<1x16x40xf32> to vector<16x40xf32>
    %c0_39 = arith.constant 0 : index
    %c0_40 = arith.constant 0 : index
    %64 = vector.load %arg9[%c0_39, %c0_40] : memref<40x128xf32, #tpu.memory_space<vmem>>, vector<40x128xf32>
    %cst_41 = arith.constant dense<0.000000e+00> : vector<16x128xf32>
    %65 = tpu.matmul %63, %64, %cst_41 {dimension_numbers = #tpu.dot_dimension_numbers<[1], [0], [0], [1], [0, 0, 1, 1], [], []>} : vector<16x40xf32>, vector<40x128xf32>, vector<16x128xf32> -> vector<16x128xf32>
    %cst_42 = arith.constant 0.000000e+00 : f32
    %66 = vector.broadcast %cst_42 : f32 to vector<16x128xf32>
    %67 = arith.maximumf %65, %66 : vector<16x128xf32>
    %68 = arith.addf %67, %41 : vector<16x128xf32>
    %cst_43 = arith.constant 0.000000e+00 : f32
    %69 = vector.broadcast %cst_43 : f32 to vector<16x128xf32>
    %70 = arith.maximumf %68, %69 : vector<16x128xf32>
    %c0_44 = arith.constant 0 : index
    %c0_45 = arith.constant 0 : index
    %71 = vector.load %arg10[%c0_44, %c0_45] : memref<16x128xf32, #tpu.memory_space<vmem>>, vector<16x128xf32>
    tpu.vector_store %arg10[%c0_44, %c0_45], %70 {strides = array<i32>} : memref<16x128xf32, #tpu.memory_space<vmem>>, vector<16x128xf32>,
    %c1_i32_46 = arith.constant 1 : i32
    %72 = arith.cmpi eq, %arg1, %c1_i32_46 : i32
    %73 = arith.extui %72 : i1 to i32
    %c0_i32_47 = arith.constant 0 : i32
    %74 = arith.cmpi ne, %73, %c0_i32_47 : i32
    scf.if %74 {
      %c0_48 = arith.constant 0 : index
      %c0_49 = arith.constant 0 : index
      %c0_50 = arith.constant 0 : index
      %75 = vector.load %arg8[%c0_48, %c0_49, %c0_50] : memref<1x16x128xf32, #tpu.memory_space<vmem>>, vector<1x16x128xf32>
      %76 = vector.shape_cast %75 : vector<1x16x128xf32> to vector<16x128xf32>
      %77 = vector.shape_cast %70 : vector<16x128xf32> to vector<1x16x128xf32>
      tpu.vector_store %arg8[%c0_48, %c0_49, %c0_50], %77 {strides = array<i32>} : memref<1x16x128xf32, #tpu.memory_space<vmem>>, vector<1x16x128xf32>,
    } else {
    }
    return
  }
  func.func @transform_0(%arg0: i32, %arg1: i32, %arg2: memref<2xi32, #tpu.memory_space<smem>>, %arg3: memref<2xi32, #tpu.memory_space<smem>>) -> (i32, i32, i32) {
    %c0_i32 = arith.constant 0 : i32
    %c0_i32_0 = arith.constant 0 : i32
    %c0_i32_1 = arith.constant 0 : i32
    return %arg0, %c0_i32, %c0_i32_0 : i32, i32, i32
  }
  func.func @transform_1(%arg0: i32, %arg1: i32, %arg2: memref<2xi32, #tpu.memory_space<smem>>, %arg3: memref<2xi32, #tpu.memory_space<smem>>) -> (i32, i32, i32) {
    %c0_i32 = arith.constant 0 : i32
    %c0_i32_0 = arith.constant 0 : i32
    %c0_i32_1 = arith.constant 0 : i32
    return %arg1, %c0_i32, %c0_i32_0 : i32, i32, i32
  }
  func.func @transform_2(%arg0: i32, %arg1: i32, %arg2: memref<2xi32, #tpu.memory_space<smem>>, %arg3: memref<2xi32, #tpu.memory_space<smem>>) -> (i32, i32, i32) {
    %c0_i32 = arith.constant 0 : i32
    %c0_i32_0 = arith.constant 0 : i32
    %c0_i32_1 = arith.constant 0 : i32
    return %arg1, %c0_i32, %c0_i32_0 : i32, i32, i32
  }
  func.func @transform_3(%arg0: i32, %arg1: i32, %arg2: memref<2xi32, #tpu.memory_space<smem>>, %arg3: memref<2xi32, #tpu.memory_space<smem>>) -> (i32, i32, i32) {
    %c0_i32 = arith.constant 0 : i32
    %c0_i32_0 = arith.constant 0 : i32
    %c0_i32_1 = arith.constant 0 : i32
    return %arg1, %c0_i32, %c0_i32_0 : i32, i32, i32
  }
  func.func @transform_4(%arg0: i32, %arg1: i32, %arg2: memref<2xi32, #tpu.memory_space<smem>>, %arg3: memref<2xi32, #tpu.memory_space<smem>>) -> (i32, i32, i32) {
    %c0_i32 = arith.constant 0 : i32
    %c0_i32_0 = arith.constant 0 : i32
    %c0_i32_1 = arith.constant 0 : i32
    return %arg0, %c0_i32, %c0_i32_0 : i32, i32, i32
  }
}

</mosaic_0001>

<llo_original>
// kernel: tpu_custom_call.1
$region0: #{tpu_custom_call.1}
  #allocation0 [shape = 'u32[]', space=smem, size = 0x4, offset = 0x4, fixed_abs, tag = 'smem constant byte address 0x4 - core index']
  #allocation1 [shape = 'u32[144,128]{1,0:T(1,128)}', space=vmem, size = 0x12000, scoped, tag = 'internal scratch']
  #allocation2 [shape = 'f32[40,128]{1,0:T(8,128)}', space=vmem, size = 0x5000, scoped, tag = 'scratch operand']
  #allocation3 [shape = 'f32[16,128]{1,0:T(8,128)}', space=vmem, size = 0x2000, scoped, tag = 'scratch operand']
  #allocation4 [shape = 's32[1]{0}', space=sflag, size = 0x4, scoped, tag = 'scoped memory for tpu_custom_call.1']
  #allocation5 [shape = 'u8[512]{0}', space=smem, size = 0x200, scoped, tag = 'prefetched SMEM operand 0']
  #allocation6 [shape = 'u8[512]{0}', space=smem, size = 0x200, scoped, tag = 'prefetched SMEM operand 1']
  %s0 = inlined_call_operand.hbm [shape: s32[2], index: 0, kind: input, shape index: {}]
  %s1 = inlined_call_operand.vmem [shape: s32[2], index: 1, kind: input, shape index: {}]
  %s2 = inlined_call_operand.hbm [shape: f32[2,16,128], index: 2, kind: input, shape index: {}]
  %s3 = inlined_call_operand.hbm [shape: f32[2,16,40], index: 3, kind: input, shape index: {}]
  %s4 = inlined_call_operand.hbm [shape: f32[2,16,40], index: 4, kind: input, shape index: {}]
  %s5 = inlined_call_operand.hbm [shape: f32[2,16,24], index: 5, kind: input, shape index: {}]
  %s6 = inlined_call_operand.hbm [shape: f32[2,16,128], index: 6, kind: output, shape index: {}]
  %s7 = sld [smem:[#allocation0]]
  $region73: #{tpu_custom_call.1} parent=0
    _
  %s9 = ssub.s32 1, %s7
  %s10 = scalar_select 0, %s9, %s7
  %12 = dma.hbm_to_smem %s0, 16, [#allocation5], [#allocation4]
  %s13 = sshll.u32 %s1, 4
  %s14 = int_to_ptr.vmem [resolvable:$true] %s13
  %16 = dma.vmem_to_smem %s14, 16, [#allocation6], [#allocation4]
  %17 = dma.done [#allocation4], 32
  %18 = sfence
  $region1: #{tpu_custom_call.1} parent=0
    #allocation7 [shape = 'u8[16384]{0}', space=vmem, size = 0x4000, scoped, tag = 'input window, operand 2']
    #allocation8 [shape = 's32[2]{0}', space=sflag, size = 0x8, scoped, tag = 'scoped memory for tpu_custom_call.1']
    #allocation9 [shape = 's32[2]{0}', space=sflag, size = 0x8, scoped, tag = 'scoped memory for tpu_custom_call.1']
    #allocation10 [shape = 'u8[16384]{0}', space=vmem, size = 0x4000, scoped, tag = 'input window, operand 3']
    #allocation11 [shape = 's32[2]{0}', space=sflag, size = 0x8, scoped, tag = 'scoped memory for tpu_custom_call.1']
    #allocation12 [shape = 'u8[16384]{0}', space=vmem, size = 0x4000, scoped, tag = 'input window, operand 4']
    #allocation13 [shape = 'u8[16384]{0}', space=vmem, size = 0x4000, scoped, tag = 'input window, operand 5']
    #allocation14 [shape = 's32[2]{0}', space=sflag, size = 0x8, scoped, tag = 'scoped memory for tpu_custom_call.1']
    #allocation15 [shape = 'u8[16384]{0}', space=vmem, size = 0x4000, scoped, tag = 'output window, operand 0']
    %19 = vsyncpa [#allocation8], 0
    %s20 = scalar_lea.sflag [#allocation8], 1
    %21 = vsyncpa %s20, 0
    %22 = vsyncpa [#allocation11], 0
    %s23 = scalar_lea.sflag [#allocation11], 1
    %24 = vsyncpa %s23, 0
    %25 = vsyncpa [#allocation14], 0
    %s26 = scalar_lea.sflag [#allocation14], 1
    %27 = vsyncpa %s26, 0
    %28 = vsyncpa [#allocation9], 0
    %s29 = scalar_lea.sflag [#allocation9], 1
    %30 = vsyncpa %s29, 0
    loop: start=0, step=1, limit=6
    $region2: #{tpu_custom_call.1} parent=1 // loop_pre_header
      _
    $region3: #{tpu_custom_call.1} parent=1 // loop_header
      %s32 = sphi 0, %s36
      %p33 = scmp.ge.s32.totalorder %s32, 6
      %s39 = sphi 0, %s51
      %s40 = sphi 0, %s47
      %s41 = sphi 0, %s39
      %s42 = sphi 0, %s40
      %s43 = sphi 0, %s41
      %s44 = sphi 0, %s42
      %s54 = sphi 0, %s56
      %s57 = sphi 0, %s54
      %s58 = sphi 0, %s57
      %s74 = sphi 0, %s58
      %s80 = sphi 0, %s82
      %s83 = sphi 0, %s80
      %s84 = sphi 0, %s83
      %s100 = sphi 0, %s84
      %s106 = sphi 0, %s108
      %s109 = sphi 0, %s106
      %s110 = sphi 0, %s109
      %s126 = sphi 0, %s110
      %s132 = sphi 0, %s134
      %s135 = sphi 0, %s132
      %s136 = sphi 0, %s135
      %s152 = sphi 0, %s136
      %s158 = sphi 0, %s160
      %s161 = sphi 0, %s158
      %s162 = sphi 0, %s161
      %s178 = sphi 0, %s162
    $region4: #{tpu_custom_call.1} parent=1 // loop_header_branch
      %35 = sbr.rel (%p33) target = $region8
    $region5: #{tpu_custom_call.1} parent=1 // loop_body
      %s37 = ssub.s32 %s32, 1
      %s38 = ssub.s32 %s32, 2
      %s45 = sadd.s32 1, %s40
      %p46 = scmp.ge.s32.totalorder %s45, 2
      %s47 = scalar_select %p46, 0, %s45
      %s48 = sadd.s32 1, %s39
      %s49 = scalar_select %p46, %s48, %s39
      %p50 = scmp.ge.s32.totalorder %s49, 2
      %s51 = scalar_select %p50, 0, %s49
      %s52 = ssub.s32 %s39, %s51
      %p53 = scmp.eq.s32.totalorder %s52, 0
      %s55 = sadd.s32 %s54, 1
      %s56 = scalar_select %p53, %s54, %s55
      %p59 = pneg %p53
      %p60 = scmp.eq.s32.totalorder %s32, 3
      %p61 = por %p59, %p60
      %p62 = scmp.ne.s32.totalorder %s54, %s57
      %p63 = scmp.eq.s32.totalorder %s32, 0
      %p64 = por %p62, %p63
      %p65 = scmp.ne.s32.totalorder %s54, %s57
      %p66 = scmp.eq.s32.totalorder %s37, 3
      %p67 = por %p65, %p66
      %p68 = scmp.ne.s32.totalorder %s57, %s58
      %p69 = scmp.eq.s32.totalorder %s37, 0
      %p70 = por %p68, %p69
      %p71 = scmp.ne.s32.totalorder %s57, %s58
      %p72 = scmp.eq.s32.totalorder %s38, 3
      %p73 = por %p71, %p72
      %p75 = scmp.ne.s32.totalorder %s58, %s74
      %p76 = scmp.eq.s32.totalorder %s38, 0
      %p77 = por %p75, %p76
      %s78 = ssub.s32 %s40, %s47
      %p79 = scmp.eq.s32.totalorder %s78, 0
      %s81 = sadd.s32 %s80, 1
      %s82 = scalar_select %p79, %s80, %s81
      %p85 = pneg %p79
      %p86 = scmp.eq.s32.totalorder %s32, 3
      %p87 = por %p85, %p86
      %p88 = scmp.ne.s32.totalorder %s80, %s83
      %p89 = scmp.eq.s32.totalorder %s32, 0
      %p90 = por %p88, %p89
      %p91 = scmp.ne.s32.totalorder %s80, %s83
      %p92 = scmp.eq.s32.totalorder %s37, 3
      %p93 = por %p91, %p92
      %p94 = scmp.ne.s32.totalorder %s83, %s84
      %p95 = scmp.eq.s32.totalorder %s37, 0
      %p96 = por %p94, %p95
      %p97 = scmp.ne.s32.totalorder %s83, %s84
      %p98 = scmp.eq.s32.totalorder %s38, 3
      %p99 = por %p97, %p98
      %p101 = scmp.ne.s32.totalorder %s84, %s100
      %p102 = scmp.eq.s32.totalorder %s38, 0
      %p103 = por %p101, %p102
      %s104 = ssub.s32 %s40, %s47
      %p105 = scmp.eq.s32.totalorder %s104, 0
      %s107 = sadd.s32 %s106, 1
      %s108 = scalar_select %p105, %s106, %s107
      %p111 = pneg %p105
      %p112 = scmp.eq.s32.totalorder %s32, 3
      %p113 = por %p111, %p112
      %p114 = scmp.ne.s32.totalorder %s106, %s109
      %p115 = scmp.eq.s32.totalorder %s32, 0
      %p116 = por %p114, %p115
      %p117 = scmp.ne.s32.totalorder %s106, %s109
      %p118 = scmp.eq.s32.totalorder %s37, 3
      %p119 = por %p117, %p118
      %p120 = scmp.ne.s32.totalorder %s109, %s110
      %p121 = scmp.eq.s32.totalorder %s37, 0
      %p122 = por %p120, %p121
      %p123 = scmp.ne.s32.totalorder %s109, %s110
      %p124 = scmp.eq.s32.totalorder %s38, 3
      %p125 = por %p123, %p124
      %p127 = scmp.ne.s32.totalorder %s110, %s126
      %p128 = scmp.eq.s32.totalorder %s38, 0
      %p129 = por %p127, %p128
      %s130 = ssub.s32 %s40, %s47
      %p131 = scmp.eq.s32.totalorder %s130, 0
      %s133 = sadd.s32 %s132, 1
      %s134 = scalar_select %p131, %s132, %s133
      %p137 = pneg %p131
      %p138 = scmp.eq.s32.totalorder %s32, 3
      %p139 = por %p137, %p138
      %p140 = scmp.ne.s32.totalorder %s132, %s135
      %p141 = scmp.eq.s32.totalorder %s32, 0
      %p142 = por %p140, %p141
      %p143 = scmp.ne.s32.totalorder %s132, %s135
      %p144 = scmp.eq.s32.totalorder %s37, 3
      %p145 = por %p143, %p144
      %p146 = scmp.ne.s32.totalorder %s135, %s136
      %p147 = scmp.eq.s32.totalorder %s37, 0
      %p148 = por %p146, %p147
      %p149 = scmp.ne.s32.totalorder %s135, %s136
      %p150 = scmp.eq.s32.totalorder %s38, 3
      %p151 = por %p149, %p150
      %p153 = scmp.ne.s32.totalorder %s136, %s152
      %p154 = scmp.eq.s32.totalorder %s38, 0
      %p155 = por %p153, %p154
      %s156 = ssub.s32 %s39, %s51
      %p157 = scmp.eq.s32.totalorder %s156, 0
      %s159 = sadd.s32 %s158, 1
      %s160 = scalar_select %p157, %s158, %s159
      %p163 = pneg %p157
      %p164 = scmp.eq.s32.totalorder %s32, 3
      %p165 = por %p163, %p164
      %p166 = scmp.ne.s32.totalorder %s158, %s161
      %p167 = scmp.eq.s32.totalorder %s32, 0
      %p168 = por %p166, %p167
      %p169 = scmp.ne.s32.totalorder %s158, %s161
      %p170 = scmp.eq.s32.totalorder %s37, 3
      %p171 = por %p169, %p170
      %p172 = scmp.ne.s32.totalorder %s161, %s162
      %p173 = scmp.eq.s32.totalorder %s37, 0
      %p174 = por %p172, %p173
      %p175 = scmp.ne.s32.totalorder %s161, %s162
      %p176 = scmp.eq.s32.totalorder %s38, 3
      %p177 = por %p175, %p176
      %p179 = scmp.ne.s32.totalorder %s162, %s178
      %p180 = scmp.eq.s32.totalorder %s38, 0
      %p181 = por %p179, %p180
      %p182 = scmp.le.s32.totalorder 1, %s32
      %p183 = scmp.lt.s32.totalorder %s32, 5
      %p184 = pnand %p182, %p183
      %p185 = pneg %p184
      // Predicated region
      $region9: #{tpu_custom_call.1} parent=5 // pred_check
        _
      $region10: #{tpu_custom_call.1} parent=5 // pred_check_branch
        %187 = sbr.rel (%p184) target = $region12
      $region11: #{tpu_custom_call.1} parent=5 // pred_region
        %s188 = ssub.s32 %s32, 1
      $region12: #{tpu_custom_call.1} parent=5 // pred_fallthru
        _
      %p189 = scmp.lt.s32.totalorder %s32, 4
      // Predicated region
      $region13: #{tpu_custom_call.1} parent=5 // pred_check
        %p190 = pneg %p189
      $region14: #{tpu_custom_call.1} parent=5 // pred_check_branch
        %192 = sbr.rel (%p190) target = $region16
      $region15: #{tpu_custom_call.1} parent=5 // pred_region
        // Predicated region
        $region17: #{tpu_custom_call.1} parent=15 // pred_check
          %p193 = pneg %p64
        $region18: #{tpu_custom_call.1} parent=15 // pred_check_branch
          %195 = sbr.rel (%p193) target = $region20
        $region19: #{tpu_custom_call.1} parent=15 // pred_region
          %s196 = sand.u32 %s54, 1
          %s197 = scalar_lea.sflag [#allocation8], %s196
          %s198 = sand.u32 %s54, 1
          %s199 = smul.addr %s198, 16
          %s200 = scalar_lea.vmem [#allocation7], %s199
          %s202 = ssub.s32 256, 256
          %203 = vsyncadd %s197, %s202
          %s204 = smul.addr %s39, 2
          %s205 = smul.addr %s204, 128
          %s206 = scalar_lea.hbm %s2, %s205
          %s207 = sshll.u32 %s200, 4
          %s208 = int_to_ptr.vmem [resolvable:$true] %s207
          %213 = dma.hbm_to_vmem [thread:$0]  %s206, 256, %s208, %s197, 128, 128, 8
        $region20: #{tpu_custom_call.1} parent=15 // pred_fallthru
          _
        // Predicated region
        $region21: #{tpu_custom_call.1} parent=15 // pred_check
          %p214 = pneg %p90
        $region22: #{tpu_custom_call.1} parent=15 // pred_check_branch
          %216 = sbr.rel (%p214) target = $region24
        $region23: #{tpu_custom_call.1} parent=15 // pred_region
          %s217 = sand.u32 %s32, 1
          %s218 = scalar_lea.sflag [#allocation11], %s217
          %s219 = sand.u32 %s80, 1
          %s220 = smul.addr %s219, 16
          %s221 = scalar_lea.vmem [#allocation10], %s220
          %s223 = ssub.s32 256, 256
          %224 = vsyncadd %s218, %s223
          %s225 = smul.addr %s40, 2
          %s226 = smul.addr %s225, 128
          %s227 = scalar_lea.hbm %s3, %s226
          %s228 = sshll.u32 %s221, 4
          %s229 = int_to_ptr.vmem [resolvable:$true] %s228
          %234 = dma.hbm_to_vmem [thread:$0]  %s227, 256, %s229, %s218, 128, 128, 8
        $region24: #{tpu_custom_call.1} parent=15 // pred_fallthru
          _
        // Predicated region
        $region25: #{tpu_custom_call.1} parent=15 // pred_check
          %p235 = pneg %p116
        $region26: #{tpu_custom_call.1} parent=15 // pred_check_branch
          %237 = sbr.rel (%p235) target = $region28
        $region27: #{tpu_custom_call.1} parent=15 // pred_region
          %s238 = sand.u32 %s32, 1
          %s239 = scalar_lea.sflag [#allocation11], %s238
          %s240 = sand.u32 %s106, 1
          %s241 = smul.addr %s240, 16
          %s242 = scalar_lea.vmem [#allocation12], %s241
          %s244 = ssub.s32 256, 256
          %245 = vsyncadd %s239, %s244
          %s246 = smul.addr %s40, 2
          %s247 = smul.addr %s246, 128
          %s248 = scalar_lea.hbm %s4, %s247
          %s249 = sshll.u32 %s242, 4
          %s250 = int_to_ptr.vmem [resolvable:$true] %s249
          %255 = dma.hbm_to_vmem [thread:$0]  %s248, 256, %s250, %s239, 128, 128, 8
        $region28: #{tpu_custom_call.1} parent=15 // pred_fallthru
          _
        // Predicated region
        $region29: #{tpu_custom_call.1} parent=15 // pred_check
          %p256 = pneg %p142
        $region30: #{tpu_custom_call.1} parent=15 // pred_check_branch
          %258 = sbr.rel (%p256) target = $region32
        $region31: #{tpu_custom_call.1} parent=15 // pred_region
          %s259 = sand.u32 %s132, 1
          %s260 = scalar_lea.sflag [#allocation14], %s259
          %s261 = sand.u32 %s132, 1
          %s262 = smul.addr %s261, 16
          %s263 = scalar_lea.vmem [#allocation13], %s262
          %s265 = ssub.s32 256, 256
          %266 = vsyncadd %s260, %s265
          %s267 = smul.addr %s40, 2
          %s268 = smul.addr %s267, 128
          %s269 = scalar_lea.hbm %s5, %s268
          %s270 = sshll.u32 %s263, 4
          %s271 = int_to_ptr.vmem [resolvable:$true] %s270
          %276 = dma.hbm_to_vmem [thread:$0]  %s269, 256, %s271, %s260, 128, 128, 8
        $region32: #{tpu_custom_call.1} parent=15 // pred_fallthru
          _
      $region16: #{tpu_custom_call.1} parent=5 // pred_fallthru
        _
      %p277 = scmp.le.s32.totalorder 1, %s32
      %p278 = scmp.lt.s32.totalorder %s32, 5
      %p279 = pnand %p277, %p278
      %p280 = pneg %p279
      // Predicated region
      $region33: #{tpu_custom_call.1} parent=5 // pred_check
        _
      $region34: #{tpu_custom_call.1} parent=5 // pred_check_branch
        %282 = sbr.rel (%p279) target = $region36
      $region35: #{tpu_custom_call.1} parent=5 // pred_region
        %s283 = ssub.s32 %s32, 1
        %s284 = sand.u32 %s57, 1
        %s285 = scalar_lea.sflag [#allocation8], %s284
        %s286 = sand.u32 %s57, 1
        %s287 = smul.addr %s286, 16
        %s288 = scalar_lea.vmem [#allocation7], %s287
        // Predicated region
        $region37: #{tpu_custom_call.1} parent=35 // pred_check
          %p289 = pneg %p70
        $region38: #{tpu_custom_call.1} parent=35 // pred_check_branch
          %291 = sbr.rel (%p289) target = $region40
        $region39: #{tpu_custom_call.1} parent=35 // pred_region
          %292 = dma.done %s285, 256
        $region40: #{tpu_custom_call.1} parent=35 // pred_fallthru
          _
        %s293 = sand.u32 %s37, 1
        %s294 = scalar_lea.sflag [#allocation11], %s293
        %s295 = sand.u32 %s83, 1
        %s296 = smul.addr %s295, 16
        %s297 = scalar_lea.vmem [#allocation10], %s296
        // Predicated region
        $region41: #{tpu_custom_call.1} parent=35 // pred_check
          %p298 = pneg %p96
        $region42: #{tpu_custom_call.1} parent=35 // pred_check_branch
          %300 = sbr.rel (%p298) target = $region44
        $region43: #{tpu_custom_call.1} parent=35 // pred_region
          %301 = dma.done %s294, 256
        $region44: #{tpu_custom_call.1} parent=35 // pred_fallthru
          _
        %s302 = sand.u32 %s37, 1
        %s303 = scalar_lea.sflag [#allocation11], %s302
        %s304 = sand.u32 %s109, 1
        %s305 = smul.addr %s304, 16
        %s306 = scalar_lea.vmem [#allocation12], %s305
        // Predicated region
        $region45: #{tpu_custom_call.1} parent=35 // pred_check
          %p307 = pneg %p122
        $region46: #{tpu_custom_call.1} parent=35 // pred_check_branch
          %309 = sbr.rel (%p307) target = $region48
        $region47: #{tpu_custom_call.1} parent=35 // pred_region
          %310 = dma.done %s303, 256
        $region48: #{tpu_custom_call.1} parent=35 // pred_fallthru
          _
        %s311 = sand.u32 %s135, 1
        %s312 = scalar_lea.sflag [#allocation14], %s311
        %s313 = sand.u32 %s135, 1
        %s314 = smul.addr %s313, 16
        %s315 = scalar_lea.vmem [#allocation13], %s314
        // Predicated region
        $region49: #{tpu_custom_call.1} parent=35 // pred_check
          %p316 = pneg %p148
        $region50: #{tpu_custom_call.1} parent=35 // pred_check_branch
          %318 = sbr.rel (%p316) target = $region52
        $region51: #{tpu_custom_call.1} parent=35 // pred_region
          %319 = dma.done %s312, 256
        $region52: #{tpu_custom_call.1} parent=35 // pred_fallthru
          _
        %s320 = sand.u32 %s57, 1
        %s321 = scalar_lea.sflag [#allocation8], %s320
        %s322 = sand.u32 %s57, 1
        %s323 = smul.addr %s322, 16
        %s324 = scalar_lea.vmem [#allocation7], %s323
        %p325 = pneg %p70
        %p326 = pneg %p67
        %s327 = sand.u32 %s37, 1
        %s328 = scalar_lea.sflag [#allocation11], %s327
        %s329 = sand.u32 %s83, 1
        %s330 = smul.addr %s329, 16
        %s331 = scalar_lea.vmem [#allocation10], %s330
        %p332 = pneg %p96
        %p333 = pneg %p93
        %s334 = sand.u32 %s37, 1
        %s335 = scalar_lea.sflag [#allocation11], %s334
        %s336 = sand.u32 %s109, 1
        %s337 = smul.addr %s336, 16
        %s338 = scalar_lea.vmem [#allocation12], %s337
        %p339 = pneg %p122
        %p340 = pneg %p119
        %s341 = sand.u32 %s135, 1
        %s342 = scalar_lea.sflag [#allocation14], %s341
        %s343 = sand.u32 %s135, 1
        %s344 = smul.addr %s343, 16
        %s345 = scalar_lea.vmem [#allocation13], %s344
        %p346 = pneg %p148
        %p347 = pneg %p145
        %p348 = pneg %p174
        %p349 = pneg %p171
        %s350 = sand.u32 %s161, 1
        %s351 = scalar_lea.sflag [#allocation9], %s350
        %s352 = sand.u32 %s161, 1
        %s353 = smul.addr %s352, 16
        %s354 = scalar_lea.vmem [#allocation15], %s353
        %s355 = sld [smem:[#allocation5 + %s42]]
        %v356 = vlaneseq
        %v357 = vand.u32 %v356, 127
        %p358 = scmp.eq.s32.totalorder %s42, 0
        // Predicated region
        $region53: #{tpu_custom_call.1} parent=35 // pred_check
          %p359 = pneg %p358
        $region54: #{tpu_custom_call.1} parent=35 // pred_check_branch
          %361 = sbr.rel (%p359) target = $region56
        $region55: #{tpu_custom_call.1} parent=35 // pred_region
          %v362 = vld [vmem:[%s288] sm:$0xff]
          %v363 = vld [vmem:[%s288 + $0x8] sm:$0xff]
          %364 = vst [vmem:[#allocation3] sm:$0xff] %v362
          %365 = vst [vmem:[#allocation3 + $0x8] sm:$0xff] %v363
          %v366 = vlaneseq
          %v367 = vshrl.u32 %v366, 7
          %vm368 = vcmp.eq.s32.totalorder %v367, 0
          %v369 = vsel %vm368, 1.0, 0.0
          %370 = vst [vmem:[#allocation2 + $0x20] sm:$0xff] %v369
        $region56: #{tpu_custom_call.1} parent=35 // pred_fallthru
          _
        %v371 = vld [vmem:[#allocation3] sm:$0xff]
        %v372 = vld [vmem:[#allocation3 + $0x8] sm:$0xff]
        %373 = vst [vmem:[#allocation2 + $0x10] sm:$0xff] %v371
        %374 = vst [vmem:[#allocation2 + $0x18] sm:$0xff] %v372
        %p375 = scmp.lt.s32.totalorder %s355, 0
        %s376 = ssub.s32 0, %s355
        %s377 = scalar_select %p375, %s376, %s355
        %s378 = sand.u32 %s377, 127
        %s379 = ssub.s32 0, %s378
        %s380 = scalar_select %p375, %s379, %s378
        %p381 = scmp.ne.s32.totalorder %s380, 0
        %p382 = scmp.lt.s32.totalorder %s380, 0
        %p383 = pnand %p382, %p381
        %p384 = pneg %p383
        %s385 = sadd.s32 %s380, 128
        %s386 = scalar_select %p384, %s385, %s380
        %s387 = sand.u32 %s386, 127
        %s388 = sand.u32 %s387, 127
        %389 = vrot.lane.b32.xlu0 %v371, %s388
        %v390 = vpop.permute.xlu0 %389
        %391 = vrot.lane.b32.xlu0 %v372, %s388
        %v392 = vpop.permute.xlu0 %391
        %v393 = vstv %s355
        %vm394 = vcmp.ge.s32.totalorder %v357, %v393
        %v395 = vsel %vm394, %v390, 0.0
        %v396 = vsel %vm394, %v392, 0.0
        %397 = vst [vmem:[#allocation2] sm:$0xff] %v395
        %398 = vst [vmem:[#allocation2 + $0x8] sm:$0xff] %v396
        %v399 = vld [vmem:[%s297] sm:$0xff]
        %v400 = vld [vmem:[%s297 + $0x8] sm:$0xff]
        %v401 = vld [vmem:[#allocation2] sm:$0xff]
        %v402 = vld [vmem:[#allocation2 + $0x8] sm:$0xff]
        %v403 = vld [vmem:[#allocation2 + $0x10] sm:$0xff]
        %v404 = vld [vmem:[#allocation2 + $0x18] sm:$0xff]
        %v405 = vld [vmem:[#allocation2 + $0x20] sm:$0xff]
        %vm406 = vcmask 326656
        %v408 = vsel %vm406, %v399, 0
        %v411 = vsel %vm406, %v400, 0
        %413 = vmatprep.subr.mxu0 0.0
        %414 = vmatpush1.msra.mxu0 0.0
        %415 = vmatprep.subr.mxu0 0.0
        %416 = vmatpush1.msra.mxu0 0.0
        %417 = vmatprep.subr.mxu0 0.0
        %418 = vmatpush1.msra.mxu0 0.0
        %419 = vmatprep.subr.mxu0 0.0
        %420 = vmatpush1.msra.mxu0 0.0
        %421 = vmatprep.subr.mxu0 0.0
        %422 = vmatpush1.msra.mxu0 0.0
        %423 = vmatprep.subr.mxu0 0.0
        %424 = vmatpush1.msra.mxu0 0.0
        %425 = vmatprep.subr.mxu0 0.0
        %426 = vmatpush1.msra.mxu0 0.0
        %427 = vmatprep.subr.mxu0 0.0
        %428 = vmatpush1.msra.mxu0 0.0
        %429 = vmatprep.subr.mxu0 0.0
        %430 = vmatpush1.msra.mxu0 0.0
        %431 = vmatprep.subr.mxu0 0.0
        %432 = vmatpush1.msra.mxu0 0.0
        %433 = vmatprep.subr.mxu0 0.0
        %434 = vmatpush1.msra.mxu0 0.0
        %435 = vmatprep.subr.mxu0 0.0
        %436 = vmatpush1.msra.mxu0 %v405
        %437 = vmatprep.subr.mxu0 0.0
        %438 = vmatpush1.msra.mxu0 %v404
        %439 = vmatprep.subr.mxu0 0.0
        %440 = vmatpush1.msra.mxu0 %v403
        %441 = vmatprep.subr.mxu0 0.0
        %442 = vmatpush1.msra.mxu0 %v402
        %443 = vmatprep.subr.mxu0 0.0
        %444 = vmatpush1.msra.mxu0 %v401
        %445 = vmatprep.subr.mxu0 0.0
        %446 = vmatpush2.msra.mxu0 0.0
        %447 = vmatprep.subr.mxu0 0.0
        %448 = vmatpush2.msra.mxu0 0.0
        %449 = vmatprep.subr.mxu0 0.0
        %450 = vmatpush2.msra.mxu0 0.0
        %451 = vmatprep.subr.mxu0 0.0
        %452 = vmatpush2.msra.mxu0 0.0
        %453 = vmatprep.subr.mxu0 0.0
        %454 = vmatpush2.msra.mxu0 0.0
        %455 = vmatprep.subr.mxu0 0.0
        %456 = vmatpush2.msra.mxu0 0.0
        %457 = vmatprep.subr.mxu0 0.0
        %458 = vmatpush2.msra.mxu0 0.0
        %459 = vmatprep.subr.mxu0 0.0
        %460 = vmatpush2.msra.mxu0 0.0
        %461 = vmatprep.subr.mxu0 0.0
        %462 = vmatpush2.msra.mxu0 0.0
        %463 = vmatprep.subr.mxu0 0.0
        %464 = vmatpush2.msra.mxu0 0.0
        %465 = vmatprep.subr.mxu0 0.0
        %466 = vmatpush2.msra.mxu0 0.0
        %467 = vmatprep.subr.mxu0 0.0
        %468 = vmatpush2.msra.mxu0 0.0
        %469 = vmatprep.subr.mxu0 0.0
        %470 = vmatpush2.msra.mxu0 0.0
        %471 = vmatprep.subr.mxu0 0.0
        %472 = vmatpush2.msra.mxu0 0.0
        %473 = vmatprep.subr.mxu0 0.0
        %474 = vmatpush2.msra.mxu0 0.0
        %475 = vmatprep.subr.mxu0 0.0
        %476 = vmatpush2.msra.mxu0 0.0
        %477 = vmatprep.mubr.f32.mxu0 0.0
        %478 = vmatmul.mubr.f32.gmra.mxu0 %v408
        %v479 = vpop.f32.mrf.mxu0
        %v480 = vadd.f32 0.0, %v479
        %v481 = vpop.f32.mrf.mxu0
        %482 = vmatprep.mubr.f32.mxu0 0.0
        %483 = vmatmul.mubr.f32.gmra.mxu0 %v411
        %v484 = vpop.f32.mrf.mxu0
        %v485 = vadd.f32 0.0, %v484
        %v486 = vpop.f32.mrf.mxu0
        %487 = vdwg.mxu0
        %v488 = vld [vmem:[%s315] sm:$0xff]
        %v489 = vld [vmem:[%s315 + $0x8] sm:$0xff]
        %vm490 = vcmask 195584
        %v492 = vsel %vm490, %v488, 0
        %v495 = vsel %vm490, %v489, 0
        %497 = vmatprep.subr.mxu0 0.0
        %498 = vmatpush1.msra.mxu0 0.0
        %499 = vmatprep.subr.mxu0 0.0
        %500 = vmatpush1.msra.mxu0 0.0
        %501 = vmatprep.subr.mxu0 0.0
        %502 = vmatpush1.msra.mxu0 0.0
        %503 = vmatprep.subr.mxu0 0.0
        %504 = vmatpush1.msra.mxu0 0.0
        %505 = vmatprep.subr.mxu0 0.0
        %506 = vmatpush1.msra.mxu0 0.0
        %507 = vmatprep.subr.mxu0 0.0
        %508 = vmatpush1.msra.mxu0 0.0
        %509 = vmatprep.subr.mxu0 0.0
        %510 = vmatpush1.msra.mxu0 0.0
        %511 = vmatprep.subr.mxu0 0.0
        %512 = vmatpush1.msra.mxu0 0.0
        %513 = vmatprep.subr.mxu0 0.0
        %514 = vmatpush1.msra.mxu0 0.0
        %515 = vmatprep.subr.mxu0 0.0
        %516 = vmatpush1.msra.mxu0 0.0
        %517 = vmatprep.subr.mxu0 0.0
        %518 = vmatpush1.msra.mxu0 0.0
        %519 = vmatprep.subr.mxu0 0.0
        %520 = vmatpush1.msra.mxu0 0.0
        %521 = vmatprep.subr.mxu0 0.0
        %522 = vmatpush1.msra.mxu0 0.0
        %523 = vmatprep.subr.mxu0 0.0
        %524 = vmatpush1.msra.mxu0 %v405
        %525 = vmatprep.subr.mxu0 0.0
        %526 = vmatpush1.msra.mxu0 %v404
        %527 = vmatprep.subr.mxu0 0.0
        %528 = vmatpush1.msra.mxu0 %v403
        %529 = vmatprep.subr.mxu0 0.0
        %530 = vmatpush2.msra.mxu0 0.0
        %531 = vmatprep.subr.mxu0 0.0
        %532 = vmatpush2.msra.mxu0 0.0
        %533 = vmatprep.subr.mxu0 0.0
        %534 = vmatpush2.msra.mxu0 0.0
        %535 = vmatprep.subr.mxu0 0.0
        %536 = vmatpush2.msra.mxu0 0.0
        %537 = vmatprep.subr.mxu0 0.0
        %538 = vmatpush2.msra.mxu0 0.0
        %539 = vmatprep.subr.mxu0 0.0
        %540 = vmatpush2.msra.mxu0 0.0
        %541 = vmatprep.subr.mxu0 0.0
        %542 = vmatpush2.msra.mxu0 0.0
        %543 = vmatprep.subr.mxu0 0.0
        %544 = vmatpush2.msra.mxu0 0.0
        %545 = vmatprep.subr.mxu0 0.0
        %546 = vmatpush2.msra.mxu0 0.0
        %547 = vmatprep.subr.mxu0 0.0
        %548 = vmatpush2.msra.mxu0 0.0
        %549 = vmatprep.subr.mxu0 0.0
        %550 = vmatpush2.msra.mxu0 0.0
        %551 = vmatprep.subr.mxu0 0.0
        %552 = vmatpush2.msra.mxu0 0.0
        %553 = vmatprep.subr.mxu0 0.0
        %554 = vmatpush2.msra.mxu0 0.0
        %555 = vmatprep.subr.mxu0 0.0
        %556 = vmatpush2.msra.mxu0 0.0
        %557 = vmatprep.subr.mxu0 0.0
        %558 = vmatpush2.msra.mxu0 0.0
        %559 = vmatprep.subr.mxu0 0.0
        %560 = vmatpush2.msra.mxu0 0.0
        %561 = vmatprep.mubr.f32.mxu0 0.0
        %562 = vmatmul.mubr.f32.gmra.mxu0 %v492
        %v563 = vpop.f32.mrf.mxu0
        %v564 = vadd.f32 0.0, %v563
        %v565 = vpop.f32.mrf.mxu0
        %566 = vmatprep.mubr.f32.mxu0 0.0
        %567 = vmatmul.mubr.f32.gmra.mxu0 %v495
        %v568 = vpop.f32.mrf.mxu0
        %v569 = vadd.f32 0.0, %v568
        %v570 = vpop.f32.mrf.mxu0
        %571 = vdwg.mxu0
        %s572 = sld [smem:[#allocation6 + %s42]]
        %s573 = scvt.s32.f32 %s572
        %v574 = vstv %s573
        %v575 = vmul.f32 %v574, %v564
        %v576 = vmul.f32 %v574, %v569
        %s577 = ssub.f32 1.0, %s573
        %v578 = vstv %s577
        %v579 = vmul.f32 %v578, %v371
        %v580 = vmul.f32 %v578, %v372
        %v581 = vadd.f32 %v575, %v579
        %v582 = vadd.f32 %v576, %v580
        %v583 = vmax.f32 %v480, 0.0
        %v584 = vmax.f32 %v485, 0.0
        %585 = vst [vmem:[#allocation2 + $0x10] sm:$0xff] %v583
        %586 = vst [vmem:[#allocation2 + $0x18] sm:$0xff] %v584
        %587 = vrot.lane.b32.xlu0 %v583, %s388
        %v588 = vpop.permute.xlu0 %587
        %589 = vrot.lane.b32.xlu0 %v584, %s388
        %v590 = vpop.permute.xlu0 %589
        %v591 = vsel %vm394, %v588, 0.0
        %v592 = vsel %vm394, %v590, 0.0
        %593 = vst [vmem:[#allocation2] sm:$0xff] %v591
        %594 = vst [vmem:[#allocation2 + $0x8] sm:$0xff] %v592
        %v595 = vld [vmem:[%s306] sm:$0xff]
        %v596 = vld [vmem:[%s306 + $0x8] sm:$0xff]
        %v597 = vld [vmem:[#allocation2] sm:$0xff]
        %v598 = vld [vmem:[#allocation2 + $0x8] sm:$0xff]
        %v599 = vld [vmem:[#allocation2 + $0x10] sm:$0xff]
        %v600 = vld [vmem:[#allocation2 + $0x18] sm:$0xff]
        %v601 = vld [vmem:[#allocation2 + $0x20] sm:$0xff]
        %v603 = vsel %vm406, %v595, 0
        %v606 = vsel %vm406, %v596, 0
        %608 = vmatprep.subr.mxu0 0.0
        %609 = vmatpush1.msra.mxu0 0.0
        %610 = vmatprep.subr.mxu0 0.0
        %611 = vmatpush1.msra.mxu0 0.0
        %612 = vmatprep.subr.mxu0 0.0
        %613 = vmatpush1.msra.mxu0 0.0
        %614 = vmatprep.subr.mxu0 0.0
        %615 = vmatpush1.msra.mxu0 0.0
        %616 = vmatprep.subr.mxu0 0.0
        %617 = vmatpush1.msra.mxu0 0.0
        %618 = vmatprep.subr.mxu0 0.0
        %619 = vmatpush1.msra.mxu0 0.0
        %620 = vmatprep.subr.mxu0 0.0
        %621 = vmatpush1.msra.mxu0 0.0
        %622 = vmatprep.subr.mxu0 0.0
        %623 = vmatpush1.msra.mxu0 0.0
        %624 = vmatprep.subr.mxu0 0.0
        %625 = vmatpush1.msra.mxu0 0.0
        %626 = vmatprep.subr.mxu0 0.0
        %627 = vmatpush1.msra.mxu0 0.0
        %628 = vmatprep.subr.mxu0 0.0
        %629 = vmatpush1.msra.mxu0 0.0
        %630 = vmatprep.subr.mxu0 0.0
        %631 = vmatpush1.msra.mxu0 %v601
        %632 = vmatprep.subr.mxu0 0.0
        %633 = vmatpush1.msra.mxu0 %v600
        %634 = vmatprep.subr.mxu0 0.0
        %635 = vmatpush1.msra.mxu0 %v599
        %636 = vmatprep.subr.mxu0 0.0
        %637 = vmatpush1.msra.mxu0 %v598
        %638 = vmatprep.subr.mxu0 0.0
        %639 = vmatpush1.msra.mxu0 %v597
        %640 = vmatprep.subr.mxu0 0.0
        %641 = vmatpush2.msra.mxu0 0.0
        %642 = vmatprep.subr.mxu0 0.0
        %643 = vmatpush2.msra.mxu0 0.0
        %644 = vmatprep.subr.mxu0 0.0
        %645 = vmatpush2.msra.mxu0 0.0
        %646 = vmatprep.subr.mxu0 0.0
        %647 = vmatpush2.msra.mxu0 0.0
        %648 = vmatprep.subr.mxu0 0.0
        %649 = vmatpush2.msra.mxu0 0.0
        %650 = vmatprep.subr.mxu0 0.0
        %651 = vmatpush2.msra.mxu0 0.0
        %652 = vmatprep.subr.mxu0 0.0
        %653 = vmatpush2.msra.mxu0 0.0
        %654 = vmatprep.subr.mxu0 0.0
        %655 = vmatpush2.msra.mxu0 0.0
        %656 = vmatprep.subr.mxu0 0.0
        %657 = vmatpush2.msra.mxu0 0.0
        %658 = vmatprep.subr.mxu0 0.0
        %659 = vmatpush2.msra.mxu0 0.0
        %660 = vmatprep.subr.mxu0 0.0
        %661 = vmatpush2.msra.mxu0 0.0
        %662 = vmatprep.subr.mxu0 0.0
        %663 = vmatpush2.msra.mxu0 0.0
        %664 = vmatprep.subr.mxu0 0.0
        %665 = vmatpush2.msra.mxu0 0.0
        %666 = vmatprep.subr.mxu0 0.0
        %667 = vmatpush2.msra.mxu0 0.0
        %668 = vmatprep.subr.mxu0 0.0
        %669 = vmatpush2.msra.mxu0 0.0
        %670 = vmatprep.subr.mxu0 0.0
        %671 = vmatpush2.msra.mxu0 0.0
        %672 = vmatprep.mubr.f32.mxu0 0.0
        %673 = vmatmul.mubr.f32.gmra.mxu0 %v603
        %v674 = vpop.f32.mrf.mxu0
        %v675 = vadd.f32 0.0, %v674
        %v676 = vpop.f32.mrf.mxu0
        %677 = vmatprep.mubr.f32.mxu0 0.0
        %678 = vmatmul.mubr.f32.gmra.mxu0 %v606
        %v679 = vpop.f32.mrf.mxu0
        %v680 = vadd.f32 0.0, %v679
        %v681 = vpop.f32.mrf.mxu0
        %682 = vdwg.mxu0
        %v683 = vmax.f32 %v675, 0.0
        %v684 = vmax.f32 %v680, 0.0
        %v685 = vadd.f32 %v683, %v581
        %v686 = vadd.f32 %v684, %v582
        %v687 = vmax.f32 %v685, 0.0
        %v688 = vmax.f32 %v686, 0.0
        %689 = vst [vmem:[#allocation3] sm:$0xff] %v687
        %690 = vst [vmem:[#allocation3 + $0x8] sm:$0xff] %v688
        %p691 = scmp.eq.s32.totalorder %s42, 1
        // Predicated region
        $region57: #{tpu_custom_call.1} parent=35 // pred_check
          %p692 = pneg %p691
        $region58: #{tpu_custom_call.1} parent=35 // pred_check_branch
          %694 = sbr.rel (%p692) target = $region60
        $region59: #{tpu_custom_call.1} parent=35 // pred_region
          %695 = vst [vmem:[%s354] sm:$0xff] %v687
          %696 = vst [vmem:[%s354 + $0x8] sm:$0xff] %v688
        $region60: #{tpu_custom_call.1} parent=35 // pred_fallthru
          _
        %s697 = sand.u32 %s161, 1
        %s698 = scalar_lea.sflag [#allocation9], %s697
        %s699 = sand.u32 %s161, 1
        %s700 = smul.addr %s699, 16
        %s701 = scalar_lea.vmem [#allocation15], %s700
        // Predicated region
        $region61: #{tpu_custom_call.1} parent=35 // pred_check
          %p702 = pneg %p171
        $region62: #{tpu_custom_call.1} parent=35 // pred_check_branch
          %704 = sbr.rel (%p702) target = $region64
        $region63: #{tpu_custom_call.1} parent=35 // pred_region
          %s706 = ssub.s32 256, 256
          %707 = vsyncadd %s698, %s706
          %s708 = smul.addr %s41, 2
          %s709 = smul.addr %s708, 128
          %s710 = scalar_lea.hbm %s6, %s709
          %s711 = sshll.u32 %s701, 4
          %s712 = int_to_ptr.vmem [resolvable:$true] %s711
          %717 = dma.vmem_to_hbm [thread:$0]  %s712, 256, %s710, %s698, 128, 128, 8
        $region64: #{tpu_custom_call.1} parent=35 // pred_fallthru
          _
      $region36: #{tpu_custom_call.1} parent=5 // pred_fallthru
        _
      %p718 = scmp.le.s32.totalorder 2, %s32
      // Predicated region
      $region65: #{tpu_custom_call.1} parent=5 // pred_check
        %p719 = pneg %p718
      $region66: #{tpu_custom_call.1} parent=5 // pred_check_branch
        %721 = sbr.rel (%p719) target = $region68
      $region67: #{tpu_custom_call.1} parent=5 // pred_region
        %s722 = ssub.s32 %s32, 2
        // Predicated region
        $region69: #{tpu_custom_call.1} parent=67 // pred_check
          %p723 = pneg %p177
        $region70: #{tpu_custom_call.1} parent=67 // pred_check_branch
          %725 = sbr.rel (%p723) target = $region72
        $region71: #{tpu_custom_call.1} parent=67 // pred_region
          %s726 = sand.u32 %s162, 1
          %s727 = scalar_lea.sflag [#allocation9], %s726
          %s728 = sand.u32 %s162, 1
          %s729 = smul.addr %s728, 16
          %s730 = scalar_lea.vmem [#allocation15], %s729
          %731 = dma.done %s727, 256
        $region72: #{tpu_custom_call.1} parent=67 // pred_fallthru
          _
      $region68: #{tpu_custom_call.1} parent=5 // pred_fallthru
        _
    $region6: #{tpu_custom_call.1} parent=1 // loop_footer
      %s36 = sadd.s32 1, %s32
    $region7: #{tpu_custom_call.1} parent=1 // loop_footer_branch
      %31 = sbr.rel target = $region3
    $region8: #{tpu_custom_call.1} parent=1 // loop_exit
      _
    %732 = vsyncpa [#allocation8], 1
    %s733 = scalar_lea.sflag [#allocation8], 1
    %734 = vsyncpa %s733, 1
    %735 = vsyncpa [#allocation11], 1
    %s736 = scalar_lea.sflag [#allocation11], 1
    %737 = vsyncpa %s736, 1
    %738 = vsyncpa [#allocation14], 1
    %s739 = scalar_lea.sflag [#allocation14], 1
    %740 = vsyncpa %s739, 1
    %741 = vsyncpa [#allocation9], 1
    %s742 = scalar_lea.sflag [#allocation9], 1
    %743 = vsyncpa %s742, 1

</llo_original>
